<compile_context>
chip_gen: v6e
topology: v6e:2x2x1
jax: 0.10.0
libtpu: 0.0.40
codegen_flags: <defaults>
</compile_context>

<pallas_src>
import jax
import jax.numpy as jnp
from jax.experimental import pallas as pl
from jax.experimental.pallas import tpu as pltpu


def _round_up(x: int, m: int) -> int:
    return (x + m - 1) // m * m


def _device_kind() -> str:
    try:
        return jax.devices()[0].device_kind.lower()
    except Exception:
        return ""


def _vmem_budget_bytes() -> int:
    """Generation-aware scoped-VMEM budget (headroom below the physical cap)."""
    kind = _device_kind()
    if "v5" in kind or "v6" in kind:
        return 96 * 1024 * 1024      # 128 MiB physical VMEM per TensorCore
    return 48 * 1024 * 1024          # v7x (64 MiB physical) / unknown: conservative


def _tensorcores_per_chip() -> int:
    kind = _device_kind()
    return 2 if ("v7" in kind or "7x" in kind) else 1


# ---------------------------------------------------------------------------
# Kernels
# ---------------------------------------------------------------------------

def _linear_kernel_resident(x_ref, w_ref, b_ref, o_ref):
    # x_ref: (tm, D_in)       streamed per batch tile
    # w_ref: (D_in, D_out_p)  VMEM-resident (constant index_map, single buffer)
    # b_ref: (1, D_out_p)     VMEM-resident
    # o_ref: (tm, D_out_p)
    acc = jnp.dot(x_ref[...], w_ref[...], preferred_element_type=jnp.float32)
    o_ref[...] = (acc + b_ref[...].astype(jnp.float32)).astype(o_ref.dtype)


def _linear_kernel_ktiled(x_ref, w_ref, b_ref, o_ref, acc_ref):
    # Same computation, with the contraction (D_in) tiled over grid axis 1.
    k = pl.program_id(1)

    @pl.when(k == 0)
    def _():
        acc_ref[...] = jnp.zeros_like(acc_ref)

    acc_ref[...] += jnp.dot(x_ref[...], w_ref[...],
                            preferred_element_type=jnp.float32)

    @pl.when(k == pl.num_programs(1) - 1)
    def _():
        o_ref[...] = (acc_ref[...] + b_ref[...].astype(jnp.float32)
                      ).astype(o_ref.dtype)


# ---------------------------------------------------------------------------
# One-time parameter preparation (hoisted out of the per-call forward)
# ---------------------------------------------------------------------------

def prepare_linear_params(weight, bias, *, param_dtype=None, pad_lanes=None):
    """Transpose weight to (D_in, D_out_p) and reshape bias to (1, D_out_p).

    Optionally zero-pads D_out up to a multiple of 128 (lane-dense, unmasked
    stores) and optionally casts params (e.g. bfloat16 for v6e/v7x).  Do this
    once at model setup, not per forward call.
    """
    D_out, D_in = weight.shape
    if param_dtype is not None:
        weight = weight.astype(param_dtype)
        bias = bias.astype(param_dtype)
    if pad_lanes is None:
        # Lane-dense output only pays off when the input row dwarfs the padded
        # output row (otherwise padded writes + post-slice cost more than
        # masked partial stores).
        pad_lanes = (D_out % 128 != 0) and (D_in >= 4 * _round_up(D_out, 128))
    D_out_p = _round_up(D_out, 128) if pad_lanes else D_out

    w_t = jnp.transpose(weight)                         # (D_in, D_out)
    if D_out_p != D_out:
        w_t = jnp.zeros((D_in, D_out_p), w_t.dtype).at[:, :D_out].set(w_t)
        b_p = jnp.zeros((1, D_out_p), bias.dtype).at[0, :D_out].set(bias)
    else:
        b_p = bias.reshape(1, D_out)
    return w_t, b_p


# ---------------------------------------------------------------------------
# Forward
# ---------------------------------------------------------------------------

def linear_forward(x, w_t, b_p, d_out=None, *, tm=None):
    """x: (B, D_in), prepared w_t: (D_in, D_out_p), b_p: (1, D_out_p) -> (B, d_out)."""
    B, D_in = x.shape
    K, D_out_p = w_t.shape
    assert K == D_in, (K, D_in)
    d_out = D_out_p if d_out is None else d_out
    out_dtype = x.dtype

    budget = _vmem_budget_bytes()
    n_cores = _tensorcores_per_chip()
    w_item = w_t.dtype.itemsize
    x_item = x.dtype.itemsize
    o_item = x.dtype.itemsize

    # --- contraction (K) tiling: keep the weight tile inside the VMEM budget.
    tk = D_in
    if D_in * D_out_p * w_item > budget // 2:
        for n_k_cand in (2, 4, 8, 16, 32, 64, 128, 256):
            cand = D_in // n_k_cand
            if (D_in % n_k_cand == 0 and cand % 8 == 0
                    and 2 * cand * D_out_p * w_item <= budget // 4):
                tk = cand
                break
        # TODO(synk): if D_in has no clean power-of-two split that fits, fall
        # back to full-D_in blocks and rely on vmem_limit_bytes headroom.
    n_k = D_in // tk
    resident = n_k == 1
    w_buf_bytes = (1 if resident else 2) * tk * D_out_p * w_item

    # --- batch (M) tiling: largest sublane-aligned tile that fits the budget.
    if tm is None:
        per_tm = (2 * tk * x_item + 2 * D_out_p * o_item
                  + (0 if resident else D_out_p * 4))          # + acc scratch
        avail = int(budget * 0.8) - w_buf_bytes - 2 * D_out_p * b_p.dtype.itemsize
        tm = max(8, min(2048, avail // per_tm) // 8 * 8)
    tm = max(8, (int(tm) // 8) * 8)
    tm = min(tm, _round_up(B, 8))
    if n_cores > 1 and B > 8:
        # Keep >= n_cores batch steps so "parallel" can shard across TensorCores.
        tm = min(tm, max(8, _round_up(pl.cdiv(B, n_cores), 8)))
    n_b = pl.cdiv(B, tm)

    def _call(single_buffer_resident):
        def spec(shape, imap, *, const=False):
            if const and single_buffer_resident:
                # Constant-index block: double-buffering buys nothing, halves VMEM.
                return pl.BlockSpec(shape, imap, pipeline_mode=pl.Buffered(1))
            return pl.BlockSpec(shape, imap)

        if resident:
            kernel = _linear_kernel_resident
            grid = (n_b,)
            in_specs = [
                pl.BlockSpec((tm, D_in), lambda i: (i, 0)),       # streamed x
                spec((D_in, D_out_p), lambda i: (0, 0), const=True),   # resident W
                spec((1, D_out_p), lambda i: (0, 0), const=True),      # resident b
            ]
            out_specs = pl.BlockSpec((tm, D_out_p), lambda i: (i, 0))
            scratch = []
            dims = ("parallel",)
        else:
            kernel = _linear_kernel_ktiled
            grid = (n_b, n_k)
            in_specs = [
                pl.BlockSpec((tm, tk), lambda i, k: (i, k)),
                pl.BlockSpec((tk, D_out_p), lambda i, k: (k, 0)),       # streamed W
                spec((1, D_out_p), lambda i, k: (0, 0), const=True),    # resident b
            ]
            out_specs = pl.BlockSpec((tm, D_out_p), lambda i, k: (i, 0))
            scratch = [pltpu.VMEM((tm, D_out_p), jnp.float32)]
            dims = ("parallel", "arbitrary")

        return pl.pallas_call(
            kernel,
            out_shape=jax.ShapeDtypeStruct((B, D_out_p), out_dtype),
            grid_spec=pltpu.PrefetchScalarGridSpec(
                num_scalar_prefetch=0,
                grid=grid,
                in_specs=in_specs,
                out_specs=out_specs,
                scratch_shapes=scratch,
            ),
            compiler_params=pltpu.CompilerParams(
                dimension_semantics=dims,
                vmem_limit_bytes=budget,
            ),
        )(x, w_t, b_p)

    try:
        out_p = _call(True)
    except Exception:
        # Some jax versions reject pl.Buffered(1); retry with default buffering
        # of the resident operands (identical semantics, slightly more VMEM).
        out_p = _call(False)

    return out_p if d_out == D_out_p else out_p[:, :d_out]


class LinearRegressionModel:
    """JAX/Pallas equivalent of the PyTorch module: forward(x) = x @ W.T + b."""

    def __init__(self, weight, bias, *, param_dtype=None):
        self.output_dim = int(weight.shape[0])
        # Params are transposed / padded / (optionally) cast ONCE here.
        self.w_t, self.b = prepare_linear_params(weight, bias,
                                                 param_dtype=param_dtype)

    def __call__(self, x):
        return linear_forward(x, self.w_t, self.b, d_out=self.output_dim)


if __name__ == "__main__":
    # Small shapes implied by the module's forward: x is [batch, input_dim].
    batch, input_dim, output_dim = 8, 32, 16

    key = jax.random.PRNGKey(0)
    kx, kw, kb = jax.random.split(key, 3)

    # Deterministic parameter init (PyTorch nn.Linear-style uniform bound).
    bound = 1.0 / (input_dim ** 0.5)
    x = jax.random.normal(kx, (batch, input_dim), dtype=jnp.float32)
    weight = jax.random.uniform(kw, (output_dim, input_dim),
                                minval=-bound, maxval=bound, dtype=jnp.float32)
    bias = jax.random.uniform(kb, (output_dim,),
                              minval=-bound, maxval=bound, dtype=jnp.float32)

    model = LinearRegressionModel(weight, bias)
    out = jax.block_until_ready(model(x))

    # Reference check against plain JAX.
    ref = x @ weight.T + bias
    assert out.shape == (batch, output_dim), out.shape
    assert jnp.allclose(out, ref, atol=1e-5, rtol=1e-5)

    print("KERNEL_OK")
</pallas_src>

<mosaic_0001>
module attributes {stable_mosaic.version = 11 : i64} {
  func.func @_linear_kernel_resident(%arg0: i32, %arg1: memref<8x32xf32, #tpu.memory_space<vmem>>, %arg2: memref<32x16xf32, #tpu.memory_space<vmem>>, %arg3: memref<1x16xf32, #tpu.memory_space<vmem>>, %arg4: memref<8x16xf32, #tpu.memory_space<vmem>>) attributes {dimension_semantics = [#tpu.dimension_semantics<parallel>], iteration_bounds = array<i64: 1>, scalar_prefetch = 0 : i64, scratch_operands = 0 : i64, tpu.core_type = #tpu.core_type<tc>, window_params = [{transform_indices = @transform_0, window_bounds = array<i64: 8, 32>}, {pipeline_mode = #tpu.pipeline_mode<synchronous>, transform_indices = @transform_1, window_bounds = array<i64: 32, 16>}, {pipeline_mode = #tpu.pipeline_mode<synchronous>, transform_indices = @transform_2, window_bounds = array<i64: 1, 16>}, {transform_indices = @transform_3, window_bounds = array<i64: 8, 16>}]} {
    %c0 = arith.constant 0 : index
    %c0_0 = arith.constant 0 : index
    %0 = vector.load %arg1[%c0, %c0_0] : memref<8x32xf32, #tpu.memory_space<vmem>>, vector<8x32xf32>
    %c0_1 = arith.constant 0 : index
    %c0_2 = arith.constant 0 : index
    %1 = vector.load %arg2[%c0_1, %c0_2] : memref<32x16xf32, #tpu.memory_space<vmem>>, vector<32x16xf32>
    %cst = arith.constant dense<0.000000e+00> : vector<8x16xf32>
    %2 = tpu.matmul %0, %1, %cst {dimension_numbers = #tpu.dot_dimension_numbers<[1], [0], [0], [1], [0, 0, 1, 1], [], []>} : vector<8x32xf32>, vector<32x16xf32>, vector<8x16xf32> -> vector<8x16xf32>
    %c0_3 = arith.constant 0 : index
    %c0_4 = arith.constant 0 : index
    %3 = vector.load %arg3[%c0_3, %c0_4] : memref<1x16xf32, #tpu.memory_space<vmem>>, vector<1x16xf32>
    %4 = vector.broadcast %3 : vector<1x16xf32> to vector<8x16xf32>
    %5 = arith.addf %2, %4 : vector<8x16xf32>
    %c0_5 = arith.constant 0 : index
    %c0_6 = arith.constant 0 : index
    %6 = vector.load %arg4[%c0_5, %c0_6] : memref<8x16xf32, #tpu.memory_space<vmem>>, vector<8x16xf32>
    tpu.vector_store %arg4[%c0_5, %c0_6], %5 {strides = array<i32>} : memref<8x16xf32, #tpu.memory_space<vmem>>, vector<8x16xf32>,
    return
  }
  func.func @transform_0(%arg0: i32) -> (i32, i32) {
    %c0_i32 = arith.constant 0 : i32
    %c0_i32_0 = arith.constant 0 : i32
    return %arg0, %c0_i32 : i32, i32
  }
  func.func @transform_1(%arg0: i32) -> (i32, i32) {
    %c0_i32 = arith.constant 0 : i32
    %c0_i32_0 = arith.constant 0 : i32
    %c0_i32_1 = arith.constant 0 : i32
    return %c0_i32, %c0_i32_0 : i32, i32
  }
  func.func @transform_2(%arg0: i32) -> (i32, i32) {
    %c0_i32 = arith.constant 0 : i32
    %c0_i32_0 = arith.constant 0 : i32
    %c0_i32_1 = arith.constant 0 : i32
    return %c0_i32, %c0_i32_0 : i32, i32
  }
  func.func @transform_3(%arg0: i32) -> (i32, i32) {
    %c0_i32 = arith.constant 0 : i32
    %c0_i32_0 = arith.constant 0 : i32
    return %arg0, %c0_i32 : i32, i32
  }
}

module attributes {stable_mosaic.version = 11 : i64} {
  func.func @_linear_kernel_resident(%arg0: i32, %arg1: memref<8x32xf32, #tpu.memory_space<vmem>>, %arg2: memref<32x16xf32, #tpu.memory_space<vmem>>, %arg3: memref<1x16xf32, #tpu.memory_space<vmem>>, %arg4: memref<8x16xf32, #tpu.memory_space<vmem>>) attributes {dimension_semantics = [#tpu.dimension_semantics<parallel>], iteration_bounds = array<i64: 1>, scalar_prefetch = 0 : i64, scratch_operands = 0 : i64, tpu.core_type = #tpu.core_type<tc>, window_params = [{transform_indices = @transform_0, window_bounds = array<i64: 8, 32>}, {pipeline_mode = #tpu.pipeline_mode<synchronous>, transform_indices = @transform_1, window_bounds = array<i64: 32, 16>}, {pipeline_mode = #tpu.pipeline_mode<synchronous>, transform_indices = @transform_2, window_bounds = array<i64: 1, 16>}, {transform_indices = @transform_3, window_bounds = array<i64: 8, 16>}]} {
    %c0 = arith.constant 0 : index
    %c0_0 = arith.constant 0 : index
    %0 = vector.load %arg1[%c0, %c0_0] : memref<8x32xf32, #tpu.memory_space<vmem>>, vector<8x32xf32>
    %c0_1 = arith.constant 0 : index
    %c0_2 = arith.constant 0 : index
    %1 = vector.load %arg2[%c0_1, %c0_2] : memref<32x16xf32, #tpu.memory_space<vmem>>, vector<32x16xf32>
    %cst = arith.constant dense<0.000000e+00> : vector<8x16xf32>
    %2 = tpu.matmul %0, %1, %cst {dimension_numbers = #tpu.dot_dimension_numbers<[1], [0], [0], [1], [0, 0, 1, 1], [], []>} : vector<8x32xf32>, vector<32x16xf32>, vector<8x16xf32> -> vector<8x16xf32>
    %c0_3 = arith.constant 0 : index
    %c0_4 = arith.constant 0 : index
    %3 = vector.load %arg3[%c0_3, %c0_4] : memref<1x16xf32, #tpu.memory_space<vmem>>, vector<1x16xf32>
    %4 = vector.broadcast %3 : vector<1x16xf32> to vector<8x16xf32>
    %5 = arith.addf %2, %4 : vector<8x16xf32>
    %c0_5 = arith.constant 0 : index
    %c0_6 = arith.constant 0 : index
    %6 = vector.load %arg4[%c0_5, %c0_6] : memref<8x16xf32, #tpu.memory_space<vmem>>, vector<8x16xf32>
    tpu.vector_store %arg4[%c0_5, %c0_6], %5 {strides = array<i32>} : memref<8x16xf32, #tpu.memory_space<vmem>>, vector<8x16xf32>,
    return
  }
  func.func @transform_0(%arg0: i32) -> (i32, i32) {
    %c0_i32 = arith.constant 0 : i32
    %c0_i32_0 = arith.constant 0 : i32
    return %arg0, %c0_i32 : i32, i32
  }
  func.func @transform_1(%arg0: i32) -> (i32, i32) {
    %c0_i32 = arith.constant 0 : i32
    %c0_i32_0 = arith.constant 0 : i32
    %c0_i32_1 = arith.constant 0 : i32
    return %c0_i32, %c0_i32_0 : i32, i32
  }
  func.func @transform_2(%arg0: i32) -> (i32, i32) {
    %c0_i32 = arith.constant 0 : i32
    %c0_i32_0 = arith.constant 0 : i32
    %c0_i32_1 = arith.constant 0 : i32
    return %c0_i32, %c0_i32_0 : i32, i32
  }
  func.func @transform_3(%arg0: i32) -> (i32, i32) {
    %c0_i32 = arith.constant 0 : i32
    %c0_i32_0 = arith.constant 0 : i32
    return %arg0, %c0_i32 : i32, i32
  }
}

</mosaic_0001>

<llo_original>
// kernel: tpu_custom_call.1
$region0: #{tpu_custom_call.1}
  #allocation0 [shape = 'u32[]', space=smem, size = 0x4, offset = 0x4, fixed_abs, tag = 'smem constant byte address 0x4 - core index']
  #allocation1 [shape = 'u32[144,128]{1,0:T(1,128)}', space=vmem, size = 0x12000, scoped, tag = 'internal scratch']
  %s0 = inlined_call_operand.vmem [shape: f32[8,32], index: 0, kind: input, shape index: {}]
  %s1 = inlined_call_operand.vmem [shape: f32[32,16], index: 1, kind: input, shape index: {}]
  %s2 = inlined_call_operand.vmem [shape: f32[1,16], index: 2, kind: input, shape index: {}]
  %s3 = inlined_call_operand.hbm [shape: f32[8,16], index: 3, kind: output, shape index: {}]
  %s4 = sld [smem:[#allocation0]]
  $region22: #{tpu_custom_call.1} parent=0
    _
  %s6 = ssub.s32 1, %s4
  %s7 = scalar_select 0, %s6, %s4
  $region1: #{tpu_custom_call.1} parent=0
    #allocation2 [shape = 'u8[4096]{0}', space=vmem, size = 0x1000, scoped, tag = 'output window, operand 0, single buffered']
    #allocation3 [shape = 's32[1]{0}', space=sflag, size = 0x4, scoped, tag = 'scoped memory for tpu_custom_call.1']
    %8 = vsyncpa [#allocation3], 0
    // Predicated region
    $region2: #{tpu_custom_call.1} parent=1 // pred_check
      _
    $region3: #{tpu_custom_call.1} parent=1 // pred_check_branch
      %10 = sbr.rel (0) target = $region5
    $region4: #{tpu_custom_call.1} parent=1 // pred_region
      _
    $region5: #{tpu_custom_call.1} parent=1 // pred_fallthru
      _
    // Predicated region
    $region6: #{tpu_custom_call.1} parent=1 // pred_check
      _
    $region7: #{tpu_custom_call.1} parent=1 // pred_check_branch
      %12 = sbr.rel (0) target = $region9
    $region8: #{tpu_custom_call.1} parent=1 // pred_region
      _
    $region9: #{tpu_custom_call.1} parent=1 // pred_fallthru
      _
    // Predicated region
    $region10: #{tpu_custom_call.1} parent=1 // pred_check
      _
    $region11: #{tpu_custom_call.1} parent=1 // pred_check_branch
      %14 = sbr.rel (0) target = $region13
    $region12: #{tpu_custom_call.1} parent=1 // pred_region
      _
    $region13: #{tpu_custom_call.1} parent=1 // pred_fallthru
      _
    %v15 = vld [vmem:[%s0] sm:$0xff]
    %v16 = vld [vmem:[%s1] sm:$0xff]
    %v17 = vld [vmem:[%s1 + $0x8] sm:$0xff]
    %v18 = vld [vmem:[%s1 + $0x10] sm:$0xff]
    %v19 = vld [vmem:[%s1 + $0x18] sm:$0xff]
    %v20 = vld [vmem:[%s2] sm:$0x1]
    %v22 = vlaneseq
    %v23 = vshrl.u32 %v22, 7
    %v24 = vsub.s32 0, %v23
    %v25 = vrot.slane %v20, %v24
    %vm27 = vcmask 261120
    %v29 = vsel %vm27, %v15, 0
    %31 = vmatprep.subr.mxu0 0.0
    %32 = vmatpush1.msra.mxu0 0.0
    %33 = vmatprep.subr.mxu0 0.0
    %34 = vmatpush1.msra.mxu0 0.0
    %35 = vmatprep.subr.mxu0 0.0
    %36 = vmatpush1.msra.mxu0 0.0
    %37 = vmatprep.subr.mxu0 0.0
    %38 = vmatpush1.msra.mxu0 0.0
    %39 = vmatprep.subr.mxu0 0.0
    %40 = vmatpush1.msra.mxu0 0.0
    %41 = vmatprep.subr.mxu0 0.0
    %42 = vmatpush1.msra.mxu0 0.0
    %43 = vmatprep.subr.mxu0 0.0
    %44 = vmatpush1.msra.mxu0 0.0
    %45 = vmatprep.subr.mxu0 0.0
    %46 = vmatpush1.msra.mxu0 0.0
    %47 = vmatprep.subr.mxu0 0.0
    %48 = vmatpush1.msra.mxu0 0.0
    %49 = vmatprep.subr.mxu0 0.0
    %50 = vmatpush1.msra.mxu0 0.0
    %51 = vmatprep.subr.mxu0 0.0
    %52 = vmatpush1.msra.mxu0 0.0
    %53 = vmatprep.subr.mxu0 0.0
    %54 = vmatpush1.msra.mxu0 0.0
    %55 = vmatprep.subr.mxu0 0.0
    %56 = vmatpush1.msra.mxu0 %v19
    %57 = vmatprep.subr.mxu0 0.0
    %58 = vmatpush1.msra.mxu0 %v18
    %59 = vmatprep.subr.mxu0 0.0
    %60 = vmatpush1.msra.mxu0 %v17
    %61 = vmatprep.subr.mxu0 0.0
    %62 = vmatpush1.msra.mxu0 %v16
    %63 = vmatprep.subr.mxu0 0.0
    %64 = vmatpush2.msra.mxu0 0.0
    %65 = vmatprep.subr.mxu0 0.0
    %66 = vmatpush2.msra.mxu0 0.0
    %67 = vmatprep.subr.mxu0 0.0
    %68 = vmatpush2.msra.mxu0 0.0
    %69 = vmatprep.subr.mxu0 0.0
    %70 = vmatpush2.msra.mxu0 0.0
    %71 = vmatprep.subr.mxu0 0.0
    %72 = vmatpush2.msra.mxu0 0.0
    %73 = vmatprep.subr.mxu0 0.0
    %74 = vmatpush2.msra.mxu0 0.0
    %75 = vmatprep.subr.mxu0 0.0
    %76 = vmatpush2.msra.mxu0 0.0
    %77 = vmatprep.subr.mxu0 0.0
    %78 = vmatpush2.msra.mxu0 0.0
    %79 = vmatprep.subr.mxu0 0.0
    %80 = vmatpush2.msra.mxu0 0.0
    %81 = vmatprep.subr.mxu0 0.0
    %82 = vmatpush2.msra.mxu0 0.0
    %83 = vmatprep.subr.mxu0 0.0
    %84 = vmatpush2.msra.mxu0 0.0
    %85 = vmatprep.subr.mxu0 0.0
    %86 = vmatpush2.msra.mxu0 0.0
    %87 = vmatprep.subr.mxu0 0.0
    %88 = vmatpush2.msra.mxu0 0.0
    %89 = vmatprep.subr.mxu0 0.0
    %90 = vmatpush2.msra.mxu0 0.0
    %91 = vmatprep.subr.mxu0 0.0
    %92 = vmatpush2.msra.mxu0 0.0
    %93 = vmatprep.subr.mxu0 0.0
    %94 = vmatpush2.msra.mxu0 0.0
    %95 = vmatprep.mubr.f32.mxu0 0.0
    %96 = vmatmul.mubr.f32.gmra.mxu0 %v29
    %v97 = vpop.f32.mrf.mxu0
    %v98 = vadd.f32 %v25, %v97
    %v99 = vpop.f32.mrf.mxu0
    %100 = vdwg.mxu0
    %vm101 = vcmask 130048
    %102 = vst.msk [vmem:[#allocation2] sm:$0xff] %vm101, %v98
    // Predicated region
    $region14: #{tpu_custom_call.1} parent=1 // pred_check
      _
    $region15: #{tpu_custom_call.1} parent=1 // pred_check_branch
      %104 = sbr.rel (0) target = $region17
    $region16: #{tpu_custom_call.1} parent=1 // pred_region
      %s106 = ssub.s32 128, 128
      %107 = vsyncadd [#allocation3], %s106
      %s109 = sshll.u32 [#allocation2], 4
      %s110 = int_to_ptr.vmem [resolvable:$true] %s109
      %112 = dma.vmem_to_hbm [thread:$0]  %s110, 128, %s3, [#allocation3]
    $region17: #{tpu_custom_call.1} parent=1 // pred_fallthru
      _
    // Predicated region
    $region18: #{tpu_custom_call.1} parent=1 // pred_check
      _
    $region19: #{tpu_custom_call.1} parent=1 // pred_check_branch
      %114 = sbr.rel (0) target = $region21
    $region20: #{tpu_custom_call.1} parent=1 // pred_region
      %115 = dma.done [#allocation3], 128
    $region21: #{tpu_custom_call.1} parent=1 // pred_fallthru
      _
    %116 = vsyncpa [#allocation3], 1

// kernel: tpu_custom_call.1
$region0: #{tpu_custom_call.1}
  #allocation0 [shape = 'u32[]', space=smem, size = 0x4, offset = 0x4, fixed_abs, tag = 'smem constant byte address 0x4 - core index']
  #allocation1 [shape = 'u32[144,128]{1,0:T(1,128)}', space=vmem, size = 0x12000, scoped, tag = 'internal scratch']
  %s0 = inlined_call_operand.vmem [shape: f32[8,32], index: 0, kind: input, shape index: {}]
  %s1 = inlined_call_operand.vmem [shape: f32[32,16], index: 1, kind: input, shape index: {}]
  %s2 = inlined_call_operand.vmem [shape: f32[1,16], index: 2, kind: input, shape index: {}]
  %s3 = inlined_call_operand.hbm [shape: f32[8,16], index: 3, kind: output, shape index: {}]
  %s4 = sld [smem:[#allocation0]]
  $region22: #{tpu_custom_call.1} parent=0
    _
  %s6 = ssub.s32 1, %s4
  %s7 = scalar_select 0, %s6, %s4
  $region1: #{tpu_custom_call.1} parent=0
    #allocation2 [shape = 'u8[4096]{0}', space=vmem, size = 0x1000, scoped, tag = 'output window, operand 0, single buffered']
    #allocation3 [shape = 's32[1]{0}', space=sflag, size = 0x4, scoped, tag = 'scoped memory for tpu_custom_call.1']
    %8 = vsyncpa [#allocation3], 0
    // Predicated region
    $region2: #{tpu_custom_call.1} parent=1 // pred_check
      _
    $region3: #{tpu_custom_call.1} parent=1 // pred_check_branch
      %10 = sbr.rel (0) target = $region5
    $region4: #{tpu_custom_call.1} parent=1 // pred_region
      _
    $region5: #{tpu_custom_call.1} parent=1 // pred_fallthru
      _
    // Predicated region
    $region6: #{tpu_custom_call.1} parent=1 // pred_check
      _
    $region7: #{tpu_custom_call.1} parent=1 // pred_check_branch
      %12 = sbr.rel (0) target = $region9
    $region8: #{tpu_custom_call.1} parent=1 // pred_region
      _
    $region9: #{tpu_custom_call.1} parent=1 // pred_fallthru
      _
    // Predicated region
    $region10: #{tpu_custom_call.1} parent=1 // pred_check
      _
    $region11: #{tpu_custom_call.1} parent=1 // pred_check_branch
      %14 = sbr.rel (0) target = $region13
    $region12: #{tpu_custom_call.1} parent=1 // pred_region
      _
    $region13: #{tpu_custom_call.1} parent=1 // pred_fallthru
      _
    %v15 = vld [vmem:[%s0] sm:$0xff]
    %v16 = vld [vmem:[%s1] sm:$0xff]
    %v17 = vld [vmem:[%s1 + $0x8] sm:$0xff]
    %v18 = vld [vmem:[%s1 + $0x10] sm:$0xff]
    %v19 = vld [vmem:[%s1 + $0x18] sm:$0xff]
    %v20 = vld [vmem:[%s2] sm:$0x1]
    %v22 = vlaneseq
    %v23 = vshrl.u32 %v22, 7
    %v24 = vsub.s32 0, %v23
    %v25 = vrot.slane %v20, %v24
    %vm27 = vcmask 261120
    %v29 = vsel %vm27, %v15, 0
    %31 = vmatprep.subr.mxu0 0.0
    %32 = vmatpush1.msra.mxu0 0.0
    %33 = vmatprep.subr.mxu0 0.0
    %34 = vmatpush1.msra.mxu0 0.0
    %35 = vmatprep.subr.mxu0 0.0
    %36 = vmatpush1.msra.mxu0 0.0
    %37 = vmatprep.subr.mxu0 0.0
    %38 = vmatpush1.msra.mxu0 0.0
    %39 = vmatprep.subr.mxu0 0.0
    %40 = vmatpush1.msra.mxu0 0.0
    %41 = vmatprep.subr.mxu0 0.0
    %42 = vmatpush1.msra.mxu0 0.0
    %43 = vmatprep.subr.mxu0 0.0
    %44 = vmatpush1.msra.mxu0 0.0
    %45 = vmatprep.subr.mxu0 0.0
    %46 = vmatpush1.msra.mxu0 0.0
    %47 = vmatprep.subr.mxu0 0.0
    %48 = vmatpush1.msra.mxu0 0.0
    %49 = vmatprep.subr.mxu0 0.0
    %50 = vmatpush1.msra.mxu0 0.0
    %51 = vmatprep.subr.mxu0 0.0
    %52 = vmatpush1.msra.mxu0 0.0
    %53 = vmatprep.subr.mxu0 0.0
    %54 = vmatpush1.msra.mxu0 0.0
    %55 = vmatprep.subr.mxu0 0.0
    %56 = vmatpush1.msra.mxu0 %v19
    %57 = vmatprep.subr.mxu0 0.0
    %58 = vmatpush1.msra.mxu0 %v18
    %59 = vmatprep.subr.mxu0 0.0
    %60 = vmatpush1.msra.mxu0 %v17
    %61 = vmatprep.subr.mxu0 0.0
    %62 = vmatpush1.msra.mxu0 %v16
    %63 = vmatprep.subr.mxu0 0.0
    %64 = vmatpush2.msra.mxu0 0.0
    %65 = vmatprep.subr.mxu0 0.0
    %66 = vmatpush2.msra.mxu0 0.0
    %67 = vmatprep.subr.mxu0 0.0
    %68 = vmatpush2.msra.mxu0 0.0
    %69 = vmatprep.subr.mxu0 0.0
    %70 = vmatpush2.msra.mxu0 0.0
    %71 = vmatprep.subr.mxu0 0.0
    %72 = vmatpush2.msra.mxu0 0.0
    %73 = vmatprep.subr.mxu0 0.0
    %74 = vmatpush2.msra.mxu0 0.0
    %75 = vmatprep.subr.mxu0 0.0
    %76 = vmatpush2.msra.mxu0 0.0
    %77 = vmatprep.subr.mxu0 0.0
    %78 = vmatpush2.msra.mxu0 0.0
    %79 = vmatprep.subr.mxu0 0.0
    %80 = vmatpush2.msra.mxu0 0.0
    %81 = vmatprep.subr.mxu0 0.0
    %82 = vmatpush2.msra.mxu0 0.0
    %83 = vmatprep.subr.mxu0 0.0
    %84 = vmatpush2.msra.mxu0 0.0
    %85 = vmatprep.subr.mxu0 0.0
    %86 = vmatpush2.msra.mxu0 0.0
    %87 = vmatprep.subr.mxu0 0.0
    %88 = vmatpush2.msra.mxu0 0.0
    %89 = vmatprep.subr.mxu0 0.0
    %90 = vmatpush2.msra.mxu0 0.0
    %91 = vmatprep.subr.mxu0 0.0
    %92 = vmatpush2.msra.mxu0 0.0
    %93 = vmatprep.subr.mxu0 0.0
    %94 = vmatpush2.msra.mxu0 0.0
    %95 = vmatprep.mubr.f32.mxu0 0.0
    %96 = vmatmul.mubr.f32.gmra.mxu0 %v29
    %v97 = vpop.f32.mrf.mxu0
    %v98 = vadd.f32 %v25, %v97
    %v99 = vpop.f32.mrf.mxu0
    %100 = vdwg.mxu0
    %vm101 = vcmask 130048
    %102 = vst.msk [vmem:[#allocation2] sm:$0xff] %vm101, %v98
    // Predicated region
    $region14: #{tpu_custom_call.1} parent=1 // pred_check
      _
    $region15: #{tpu_custom_call.1} parent=1 // pred_check_branch
      %104 = sbr.rel (0) target = $region17
    $region16: #{tpu_custom_call.1} parent=1 // pred_region
      %s106 = ssub.s32 128, 128
      %107 = vsyncadd [#allocation3], %s106
      %s109 = sshll.u32 [#allocation2], 4
      %s110 = int_to_ptr.vmem [resolvable:$true] %s109
      %112 = dma.vmem_to_hbm [thread:$0]  %s110, 128, %s3, [#allocation3]
    $region17: #{tpu_custom_call.1} parent=1 // pred_fallthru
      _
    // Predicated region
    $region18: #{tpu_custom_call.1} parent=1 // pred_check
      _
    $region19: #{tpu_custom_call.1} parent=1 // pred_check_branch
      %114 = sbr.rel (0) target = $region21
    $region20: #{tpu_custom_call.1} parent=1 // pred_region
      %115 = dma.done [#allocation3], 128
    $region21: #{tpu_custom_call.1} parent=1 // pred_fallthru
      _
    %116 = vsyncpa [#allocation3], 1

</llo_original>
